<compile_context>
chip_gen: v7x
topology: tpu7x:2x2x1
jax: 0.10.0
libtpu: 0.0.40
codegen_flags: <defaults>
</compile_context>

<pallas_src>
import jax
import jax.numpy as jnp
from jax.experimental import pallas as pl
from jax.experimental.pallas import tpu as pltpu

_LANE = 128  # vreg lane width


def _mlp_kernel(x_ref,
                w1_ref, b1_ref,
                w2_ref, b2_ref,
                w3_ref, b3_ref,
                w4_ref, b4_ref,
                out_ref):
    """Fused MLP forward for one batch tile.

    All matmuls hit the MXU with bf16 operands / f32 accumulation; bias adds
    and ReLUs run on the VPU in f32; no intermediate HBM round-trips.
    """
    # Layer 1: (tb, in) @ (in, 256) + (1, 256) -> ReLU
    h = jnp.dot(x_ref[...].astype(jnp.bfloat16), w1_ref[...],
                preferred_element_type=jnp.float32) + b1_ref[...]
    h = jnp.maximum(h, 0.0)

    # Layer 2: (tb, 256) @ (256, 128) + (1, 128) -> ReLU
    h = jnp.dot(h.astype(jnp.bfloat16), w2_ref[...],
                preferred_element_type=jnp.float32) + b2_ref[...]
    h = jnp.maximum(h, 0.0)

    # Layer 3 (N lane-padded 32 -> 128 with zeros; exact under ReLU):
    # (tb, 128) @ (128, 128) + (1, 128) -> ReLU
    h = jnp.dot(h.astype(jnp.bfloat16), w3_ref[...],
                preferred_element_type=jnp.float32) + b3_ref[...]
    h = jnp.maximum(h, 0.0)

    # Layer 4 (output head): K padded 32 -> 128 with zero rows (exact),
    # true N = 2.  (tb, 128) @ (128, 2) + (1, 2), no activation.
    y = jnp.dot(h.astype(jnp.bfloat16), w4_ref[...],
                preferred_element_type=jnp.float32) + b4_ref[...]

    out_ref[...] = y.astype(out_ref.dtype)


def _round_up(x, m):
    return ((x + m - 1) // m) * m


def _pick_block_batch(batch):
    """Sublane/MXU-aligned batch tile.

    <=1024 rows: one tile (padded to the sublane multiple of 8) — per-grid-step
    overhead (~0.35 us) dominates for this tiny MLP, so don't split small work.
    >1024 rows: 256-aligned tiles capped at 2048 rows, block count forced even
    so v7x's two TensorCores stay balanced; larger tiles also amortize step
    overhead on v5e/v6e (single TC).
    """
    if batch <= 1024:
        return _round_up(batch, 8)
    n_blocks = pl.cdiv(batch, 2048)
    if n_blocks % 2:
        n_blocks += 1  # even grid length -> balanced megacore sharding on v7x
    return min(2048, _round_up(pl.cdiv(batch, n_blocks), 256))


def mlp_forward(x, params, *, block_batch=None):
    """Run the fused MLP Pallas kernel.

    Args:
      x: (batch, input_size) array, preferably bf16 (produced in bf16 at the
        source); f32 also accepted.
      params: dict from init_params (bf16 pre-transposed / pre-padded weights,
        f32 biases).
      block_batch: optional batch tile size (multiple of 8).
    Returns:
      (batch, 2) float32 output.
    """
    batch, in_dim = x.shape
    out_dim = params["b4"].shape[1]  # 2

    # --- batch tiling ---
    if block_batch is None:
        block_batch = _pick_block_batch(batch)
    assert block_batch % 8 == 0, "block_batch must be a multiple of 8"
    padded_batch = _round_up(batch, block_batch)
    if padded_batch != batch:
        x = jnp.pad(x, ((0, padded_batch - batch), (0, 0)))
    grid = (padded_batch // block_batch,)

    def x_map(i):
        return (i, 0)

    def full_map(i):
        return (0, 0)

    in_specs = [
        pl.BlockSpec((block_batch, in_dim), x_map),
        pl.BlockSpec(params["w1"].shape, full_map),
        pl.BlockSpec(params["b1"].shape, full_map),
        pl.BlockSpec(params["w2"].shape, full_map),
        pl.BlockSpec(params["b2"].shape, full_map),
        pl.BlockSpec(params["w3"].shape, full_map),
        pl.BlockSpec(params["b3"].shape, full_map),
        pl.BlockSpec(params["w4"].shape, full_map),
        pl.BlockSpec(params["b4"].shape, full_map),
    ]
    # Narrow output: block last dim equals the full (2-wide) array dim -> legal,
    # and only 8 B/row of HBM writeback instead of 512 B/row.
    out_specs = pl.BlockSpec((block_batch, out_dim), x_map)

    out = pl.pallas_call(
        _mlp_kernel,
        out_shape=jax.ShapeDtypeStruct((padded_batch, out_dim), jnp.float32),
        grid=grid,
        in_specs=in_specs,
        out_specs=out_specs,
        compiler_params=pltpu.CompilerParams(
            dimension_semantics=("parallel",),
            vmem_limit_bytes=32 * 1024 * 1024,
        ),
    )(x, params["w1"], params["b1"], params["w2"], params["b2"],
      params["w3"], params["b3"], params["w4"], params["b4"])

    # Strip batch padding only (no lane padding on the output anymore).
    if padded_batch != batch:
        out = out[:batch]
    return out


def init_params(key, input_size):
    """Deterministic init matching MLP.__init__ layer shapes.

    PyTorch nn.Linear stores weight as (out, in); we init that way, transpose
    to (in, out) for x @ W, store weights in bf16 for the bf16-native MXUs
    (biases stay f32), and apply the kernel's padding ONCE here:
      * w3/b3 lane-padded 32 -> 128 output columns (zeros; exact under ReLU),
      * w4 K-padded 32 -> 128 rows (zeros; contribute nothing), N kept at 2.
    """
    dims = [(256, input_size), (128, 256), (32, 128), (2, 32)]
    raw = {}
    for idx, (fan_out, fan_in) in enumerate(dims, start=1):
        key, kw, kb = jax.random.split(key, 3)
        bound = 1.0 / jnp.sqrt(fan_in)  # same scale rule as nn.Linear default
        w = jax.random.uniform(kw, (fan_out, fan_in), jnp.float32, -bound, bound)
        b = jax.random.uniform(kb, (fan_out,), jnp.float32, -bound, bound)
        raw[f"w{idx}"] = w.T                    # (in, out)
        raw[f"b{idx}"] = b.reshape(1, fan_out)  # (1, out)

    h3 = raw["w3"].shape[1]  # 32
    params = {
        "w1": raw["w1"].astype(jnp.bfloat16),
        "b1": raw["b1"],
        "w2": raw["w2"].astype(jnp.bfloat16),
        "b2": raw["b2"],
        "w3": jnp.pad(raw["w3"], ((0, 0), (0, _LANE - h3))).astype(jnp.bfloat16),
        "b3": jnp.pad(raw["b3"], ((0, 0), (0, _LANE - h3))),
        "w4": jnp.pad(raw["w4"], ((0, _LANE - h3), (0, 0))).astype(jnp.bfloat16),
        "b4": raw["b4"],
    }
    return params


def mlp_reference(x, params):
    """Plain-JAX reference in matching precision (bf16 matmul, f32 accumulate).

    Uses the same pre-padded parameters; the zero padding is numerically exact
    under ReLU and the K-only padding of the head.
    """
    def lin(h, w, b):
        return jnp.dot(h.astype(jnp.bfloat16), w,
                       preferred_element_type=jnp.float32) + b
    h = jnp.maximum(lin(x, params["w1"], params["b1"]), 0.0)
    h = jnp.maximum(lin(h, params["w2"], params["b2"]), 0.0)
    h = jnp.maximum(lin(h, params["w3"], params["b3"]), 0.0)
    return lin(h, params["w4"], params["b4"])


if __name__ == "__main__":
    key = jax.random.PRNGKey(0)
    key, kx = jax.random.split(key)

    batch = 8
    input_size = 16                      # Boston-style tabular features
    # Produce the input in bf16 at the source (no separate wrapper-side cast).
    x = jax.random.normal(kx, (batch, input_size), jnp.float32).astype(jnp.bfloat16)

    params = init_params(key, input_size)

    out = mlp_forward(x, params)
    out = jax.block_until_ready(out)

    ref = mlp_reference(x, params)
    assert out.shape == (batch, 2), out.shape
    assert jnp.allclose(out, ref, atol=1e-2, rtol=1e-2), "mismatch vs reference"

    # TODO(synk): training loop / L1Loss / Adam / DataLoader from run_training
    # are host-side concerns and intentionally not part of the Pallas kernel.
    print("KERNEL_OK")
</pallas_src>

<mosaic_0001>
module attributes {stable_mosaic.version = 11 : i64} {
  func.func @_mlp_kernel(%arg0: i32, %arg1: memref<8x16xbf16, #tpu.memory_space<vmem>>, %arg2: memref<16x256xbf16, #tpu.memory_space<vmem>>, %arg3: memref<1x256xf32, #tpu.memory_space<vmem>>, %arg4: memref<256x128xbf16, #tpu.memory_space<vmem>>, %arg5: memref<1x128xf32, #tpu.memory_space<vmem>>, %arg6: memref<128x128xbf16, #tpu.memory_space<vmem>>, %arg7: memref<1x128xf32, #tpu.memory_space<vmem>>, %arg8: memref<128x2xbf16, #tpu.memory_space<vmem>>, %arg9: memref<1x2xf32, #tpu.memory_space<vmem>>, %arg10: memref<8x2xf32, #tpu.memory_space<vmem>>) attributes {dimension_semantics = [#tpu.dimension_semantics<parallel>], iteration_bounds = array<i64: 1>, scalar_prefetch = 0 : i64, scratch_operands = 0 : i64, tpu.core_type = #tpu.core_type<tc>, window_params = [{transform_indices = @transform_0, window_bounds = array<i64: 8, 16>}, {pipeline_mode = #tpu.pipeline_mode<synchronous>, transform_indices = @transform_1, window_bounds = array<i64: 16, 256>}, {pipeline_mode = #tpu.pipeline_mode<synchronous>, transform_indices = @transform_2, window_bounds = array<i64: 1, 256>}, {pipeline_mode = #tpu.pipeline_mode<synchronous>, transform_indices = @transform_3, window_bounds = array<i64: 256, 128>}, {pipeline_mode = #tpu.pipeline_mode<synchronous>, transform_indices = @transform_4, window_bounds = array<i64: 1, 128>}, {pipeline_mode = #tpu.pipeline_mode<synchronous>, transform_indices = @transform_5, window_bounds = array<i64: 128, 128>}, {pipeline_mode = #tpu.pipeline_mode<synchronous>, transform_indices = @transform_6, window_bounds = array<i64: 1, 128>}, {pipeline_mode = #tpu.pipeline_mode<synchronous>, transform_indices = @transform_7, window_bounds = array<i64: 128, 2>}, {pipeline_mode = #tpu.pipeline_mode<synchronous>, transform_indices = @transform_8, window_bounds = array<i64: 1, 2>}, {transform_indices = @transform_9, window_bounds = array<i64: 8, 2>}]} {
    %c0 = arith.constant 0 : index
    %c0_0 = arith.constant 0 : index
    %0 = vector.load %arg1[%c0, %c0_0] : memref<8x16xbf16, #tpu.memory_space<vmem>>, vector<8x16xbf16>
    %c0_1 = arith.constant 0 : index
    %c0_2 = arith.constant 0 : index
    %1 = vector.load %arg2[%c0_1, %c0_2] : memref<16x256xbf16, #tpu.memory_space<vmem>>, vector<16x256xbf16>
    %cst = arith.constant dense<0.000000e+00> : vector<8x256xf32>
    %2 = tpu.matmul %0, %1, %cst {dimension_numbers = #tpu.dot_dimension_numbers<[1], [0], [0], [1], [0, 0, 1, 1], [], []>} : vector<8x16xbf16>, vector<16x256xbf16>, vector<8x256xf32> -> vector<8x256xf32>
    %c0_3 = arith.constant 0 : index
    %c0_4 = arith.constant 0 : index
    %3 = vector.load %arg3[%c0_3, %c0_4] : memref<1x256xf32, #tpu.memory_space<vmem>>, vector<1x256xf32>
    %4 = vector.broadcast %3 : vector<1x256xf32> to vector<8x256xf32>
    %5 = arith.addf %2, %4 : vector<8x256xf32>
    %cst_5 = arith.constant 0.000000e+00 : f32
    %6 = vector.broadcast %cst_5 : f32 to vector<8x256xf32>
    %7 = arith.maximumf %5, %6 : vector<8x256xf32>
    %8 = arith.truncf %7 : vector<8x256xf32> to vector<8x256xbf16>
    %c0_6 = arith.constant 0 : index
    %c0_7 = arith.constant 0 : index
    %9 = vector.load %arg4[%c0_6, %c0_7] : memref<256x128xbf16, #tpu.memory_space<vmem>>, vector<256x128xbf16>
    %cst_8 = arith.constant dense<0.000000e+00> : vector<8x128xf32>
    %10 = tpu.matmul %8, %9, %cst_8 {dimension_numbers = #tpu.dot_dimension_numbers<[1], [0], [0], [1], [0, 0, 1, 1], [], []>} : vector<8x256xbf16>, vector<256x128xbf16>, vector<8x128xf32> -> vector<8x128xf32>
    %c0_9 = arith.constant 0 : index
    %c0_10 = arith.constant 0 : index
    %11 = vector.load %arg5[%c0_9, %c0_10] : memref<1x128xf32, #tpu.memory_space<vmem>>, vector<1x128xf32>
    %12 = vector.broadcast %11 : vector<1x128xf32> to vector<8x128xf32>
    %13 = arith.addf %10, %12 : vector<8x128xf32>
    %cst_11 = arith.constant 0.000000e+00 : f32
    %14 = vector.broadcast %cst_11 : f32 to vector<8x128xf32>
    %15 = arith.maximumf %13, %14 : vector<8x128xf32>
    %16 = arith.truncf %15 : vector<8x128xf32> to vector<8x128xbf16>
    %c0_12 = arith.constant 0 : index
    %c0_13 = arith.constant 0 : index
    %17 = vector.load %arg6[%c0_12, %c0_13] : memref<128x128xbf16, #tpu.memory_space<vmem>>, vector<128x128xbf16>
    %cst_14 = arith.constant dense<0.000000e+00> : vector<8x128xf32>
    %18 = tpu.matmul %16, %17, %cst_14 {dimension_numbers = #tpu.dot_dimension_numbers<[1], [0], [0], [1], [0, 0, 1, 1], [], []>} : vector<8x128xbf16>, vector<128x128xbf16>, vector<8x128xf32> -> vector<8x128xf32>
    %c0_15 = arith.constant 0 : index
    %c0_16 = arith.constant 0 : index
    %19 = vector.load %arg7[%c0_15, %c0_16] : memref<1x128xf32, #tpu.memory_space<vmem>>, vector<1x128xf32>
    %20 = vector.broadcast %19 : vector<1x128xf32> to vector<8x128xf32>
    %21 = arith.addf %18, %20 : vector<8x128xf32>
    %cst_17 = arith.constant 0.000000e+00 : f32
    %22 = vector.broadcast %cst_17 : f32 to vector<8x128xf32>
    %23 = arith.maximumf %21, %22 : vector<8x128xf32>
    %24 = arith.truncf %23 : vector<8x128xf32> to vector<8x128xbf16>
    %c0_18 = arith.constant 0 : index
    %c0_19 = arith.constant 0 : index
    %25 = vector.load %arg8[%c0_18, %c0_19] : memref<128x2xbf16, #tpu.memory_space<vmem>>, vector<128x2xbf16>
    %cst_20 = arith.constant dense<0.000000e+00> : vector<8x2xf32>
    %26 = tpu.matmul %24, %25, %cst_20 {dimension_numbers = #tpu.dot_dimension_numbers<[1], [0], [0], [1], [0, 0, 1, 1], [], []>} : vector<8x128xbf16>, vector<128x2xbf16>, vector<8x2xf32> -> vector<8x2xf32>
    %c0_21 = arith.constant 0 : index
    %c0_22 = arith.constant 0 : index
    %27 = vector.load %arg9[%c0_21, %c0_22] : memref<1x2xf32, #tpu.memory_space<vmem>>, vector<1x2xf32>
    %28 = vector.broadcast %27 : vector<1x2xf32> to vector<8x2xf32>
    %29 = arith.addf %26, %28 : vector<8x2xf32>
    %c0_23 = arith.constant 0 : index
    %c0_24 = arith.constant 0 : index
    %30 = vector.load %arg10[%c0_23, %c0_24] : memref<8x2xf32, #tpu.memory_space<vmem>>, vector<8x2xf32>
    tpu.vector_store %arg10[%c0_23, %c0_24], %29 {strides = array<i32>} : memref<8x2xf32, #tpu.memory_space<vmem>>, vector<8x2xf32>,
    return
  }
  func.func @transform_0(%arg0: i32) -> (i32, i32) {
    %c0_i32 = arith.constant 0 : i32
    %c0_i32_0 = arith.constant 0 : i32
    return %arg0, %c0_i32 : i32, i32
  }
  func.func @transform_1(%arg0: i32) -> (i32, i32) {
    %c0_i32 = arith.constant 0 : i32
    %c0_i32_0 = arith.constant 0 : i32
    %c0_i32_1 = arith.constant 0 : i32
    return %c0_i32, %c0_i32_0 : i32, i32
  }
  func.func @transform_2(%arg0: i32) -> (i32, i32) {
    %c0_i32 = arith.constant 0 : i32
    %c0_i32_0 = arith.constant 0 : i32
    %c0_i32_1 = arith.constant 0 : i32
    return %c0_i32, %c0_i32_0 : i32, i32
  }
  func.func @transform_3(%arg0: i32) -> (i32, i32) {
    %c0_i32 = arith.constant 0 : i32
    %c0_i32_0 = arith.constant 0 : i32
    %c0_i32_1 = arith.constant 0 : i32
    return %c0_i32, %c0_i32_0 : i32, i32
  }
  func.func @transform_4(%arg0: i32) -> (i32, i32) {
    %c0_i32 = arith.constant 0 : i32
    %c0_i32_0 = arith.constant 0 : i32
    %c0_i32_1 = arith.constant 0 : i32
    return %c0_i32, %c0_i32_0 : i32, i32
  }
  func.func @transform_5(%arg0: i32) -> (i32, i32) {
    %c0_i32 = arith.constant 0 : i32
    %c0_i32_0 = arith.constant 0 : i32
    %c0_i32_1 = arith.constant 0 : i32
    return %c0_i32, %c0_i32_0 : i32, i32
  }
  func.func @transform_6(%arg0: i32) -> (i32, i32) {
    %c0_i32 = arith.constant 0 : i32
    %c0_i32_0 = arith.constant 0 : i32
    %c0_i32_1 = arith.constant 0 : i32
    return %c0_i32, %c0_i32_0 : i32, i32
  }
  func.func @transform_7(%arg0: i32) -> (i32, i32) {
    %c0_i32 = arith.constant 0 : i32
    %c0_i32_0 = arith.constant 0 : i32
    %c0_i32_1 = arith.constant 0 : i32
    return %c0_i32, %c0_i32_0 : i32, i32
  }
  func.func @transform_8(%arg0: i32) -> (i32, i32) {
    %c0_i32 = arith.constant 0 : i32
    %c0_i32_0 = arith.constant 0 : i32
    %c0_i32_1 = arith.constant 0 : i32
    return %c0_i32, %c0_i32_0 : i32, i32
  }
  func.func @transform_9(%arg0: i32) -> (i32, i32) {
    %c0_i32 = arith.constant 0 : i32
    %c0_i32_0 = arith.constant 0 : i32
    return %arg0, %c0_i32 : i32, i32
  }
}

</mosaic_0001>

<llo_original>
// kernel: tpu_custom_call.1
$region0: #{tpu_custom_call.1}
  #allocation0 [shape = 'u32[]', space=smem, size = 0x4, offset = 0x4, fixed_abs, tag = 'smem constant byte address 0x4 - core index']
  #allocation1 [shape = 'u32[144,128]{1,0:T(1,128)}', space=vmem, size = 0x12000, scoped, tag = 'internal scratch']
  %s0 = inlined_call_operand.hbm [shape: bf16[8,16], index: 0, kind: input, shape index: {}]
  %s1 = inlined_call_operand.vmem [shape: bf16[16,256], index: 1, kind: input, shape index: {}]
  %s2 = inlined_call_operand.vmem [shape: f32[1,256], index: 2, kind: input, shape index: {}]
  %s3 = inlined_call_operand.hbm [shape: bf16[256,128], index: 3, kind: input, shape index: {}]
  %s4 = inlined_call_operand.vmem [shape: f32[1,128], index: 4, kind: input, shape index: {}]
  %s5 = inlined_call_operand.vmem [shape: bf16[128,128], index: 5, kind: input, shape index: {}]
  %s6 = inlined_call_operand.vmem [shape: f32[1,128], index: 6, kind: input, shape index: {}]
  %s7 = inlined_call_operand.vmem [shape: bf16[128,2], index: 7, kind: input, shape index: {}]
  %s8 = inlined_call_operand.vmem [shape: f32[1,2], index: 8, kind: input, shape index: {}]
  %s9 = inlined_call_operand.vmem [shape: f32[8,2], index: 9, kind: output, shape index: {}]
  %s10 = sld [smem:[#allocation0]]
  $region54: #{tpu_custom_call.1} parent=0
    _
  %s12 = ssub.s32 1, %s10
  %s13 = scalar_select 0, %s12, %s10
  $region1: #{tpu_custom_call.1} parent=0
    #allocation2 [shape = 'u8[2048]{0}', space=vmem, size = 0x800, scoped, tag = 'input window, operand 0, single buffered']
    #allocation3 [shape = 's32[1]{0}', space=sflag, size = 0x4, scoped, tag = 'scoped memory for tpu_custom_call.1']
    #allocation4 [shape = 'u8[65536]{0}', space=vmem, size = 0x10000, scoped, tag = 'input window, operand 3, single buffered']
    #allocation5 [shape = 's32[1]{0}', space=sflag, size = 0x4, scoped, tag = 'scoped memory for tpu_custom_call.1']
    %14 = vsyncpa [#allocation3], 0
    %15 = vsyncpa [#allocation5], 0
    // Predicated region
    $region2: #{tpu_custom_call.1} parent=1 // pred_check
      _
    $region3: #{tpu_custom_call.1} parent=1 // pred_check_branch
      %17 = sbr.rel (0) target = $region5
    $region4: #{tpu_custom_call.1} parent=1 // pred_region
      %s19 = ssub.s32 64, 64
      %20 = vsyncadd [#allocation3], %s19
      %s22 = sshll.u32 [#allocation2], 4
      %s23 = int_to_ptr.vmem [resolvable:$true] %s22
      %25 = dma.hbm_to_vmem [thread:$0]  %s0, 64, %s23, [#allocation3]
    $region5: #{tpu_custom_call.1} parent=1 // pred_fallthru
      _
    // Predicated region
    $region6: #{tpu_custom_call.1} parent=1 // pred_check
      _
    $region7: #{tpu_custom_call.1} parent=1 // pred_check_branch
      %27 = sbr.rel (0) target = $region9
    $region8: #{tpu_custom_call.1} parent=1 // pred_region
      _
    $region9: #{tpu_custom_call.1} parent=1 // pred_fallthru
      _
    // Predicated region
    $region10: #{tpu_custom_call.1} parent=1 // pred_check
      _
    $region11: #{tpu_custom_call.1} parent=1 // pred_check_branch
      %29 = sbr.rel (0) target = $region13
    $region12: #{tpu_custom_call.1} parent=1 // pred_region
      _
    $region13: #{tpu_custom_call.1} parent=1 // pred_fallthru
      _
    // Predicated region
    $region14: #{tpu_custom_call.1} parent=1 // pred_check
      _
    $region15: #{tpu_custom_call.1} parent=1 // pred_check_branch
      %31 = sbr.rel (0) target = $region17
    $region16: #{tpu_custom_call.1} parent=1 // pred_region
      %s33 = ssub.s32 2048, 2048
      %34 = vsyncadd [#allocation5], %s33
      %s35 = sshll.u32 [#allocation4], 4
      %s36 = int_to_ptr.vmem [resolvable:$true] %s35
      %41 = dma.hbm_to_vmem [thread:$0]  %s3, 2048, %s36, [#allocation5], 64, 64, 4
    $region17: #{tpu_custom_call.1} parent=1 // pred_fallthru
      _
    // Predicated region
    $region18: #{tpu_custom_call.1} parent=1 // pred_check
      _
    $region19: #{tpu_custom_call.1} parent=1 // pred_check_branch
      %43 = sbr.rel (0) target = $region21
    $region20: #{tpu_custom_call.1} parent=1 // pred_region
      _
    $region21: #{tpu_custom_call.1} parent=1 // pred_fallthru
      _
    // Predicated region
    $region22: #{tpu_custom_call.1} parent=1 // pred_check
      _
    $region23: #{tpu_custom_call.1} parent=1 // pred_check_branch
      %45 = sbr.rel (0) target = $region25
    $region24: #{tpu_custom_call.1} parent=1 // pred_region
      _
    $region25: #{tpu_custom_call.1} parent=1 // pred_fallthru
      _
    // Predicated region
    $region26: #{tpu_custom_call.1} parent=1 // pred_check
      _
    $region27: #{tpu_custom_call.1} parent=1 // pred_check_branch
      %47 = sbr.rel (0) target = $region29
    $region28: #{tpu_custom_call.1} parent=1 // pred_region
      _
    $region29: #{tpu_custom_call.1} parent=1 // pred_fallthru
      _
    // Predicated region
    $region30: #{tpu_custom_call.1} parent=1 // pred_check
      _
    $region31: #{tpu_custom_call.1} parent=1 // pred_check_branch
      %49 = sbr.rel (0) target = $region33
    $region32: #{tpu_custom_call.1} parent=1 // pred_region
      _
    $region33: #{tpu_custom_call.1} parent=1 // pred_fallthru
      _
    // Predicated region
    $region34: #{tpu_custom_call.1} parent=1 // pred_check
      _
    $region35: #{tpu_custom_call.1} parent=1 // pred_check_branch
      %51 = sbr.rel (0) target = $region37
    $region36: #{tpu_custom_call.1} parent=1 // pred_region
      _
    $region37: #{tpu_custom_call.1} parent=1 // pred_fallthru
      _
    // Predicated region
    $region38: #{tpu_custom_call.1} parent=1 // pred_check
      _
    $region39: #{tpu_custom_call.1} parent=1 // pred_check_branch
      %53 = sbr.rel (0) target = $region41
    $region40: #{tpu_custom_call.1} parent=1 // pred_region
      %54 = dma.done [#allocation3], 64
    $region41: #{tpu_custom_call.1} parent=1 // pred_fallthru
      _
    // Predicated region
    $region42: #{tpu_custom_call.1} parent=1 // pred_check
      _
    $region43: #{tpu_custom_call.1} parent=1 // pred_check_branch
      %56 = sbr.rel (0) target = $region45
    $region44: #{tpu_custom_call.1} parent=1 // pred_region
      %57 = dma.done [#allocation5], 2048
    $region45: #{tpu_custom_call.1} parent=1 // pred_fallthru
      _
    %v59 = vld [vmem:[#allocation2] sm:$0xf]
    %v60 = vld [vmem:[%s1] sm:$0xff]
    %v61 = vld [vmem:[%s1 + $0x8] sm:$0xff]
    %v62 = vld [vmem:[%s2] sm:$0x3]
    %v64 = vlaneseq
    %v65 = vshrl.u32 %v64, 7
    %v66 = vsub.s32 0, %v65
    %v67 = vrot.slane %v62, %v66
    %v68 = vlaneseq
    %v69 = vshrl.u32 %v68, 7
    %v70 = vsub.s32 1, %v69
    %v71 = vrot.slane %v62, %v70
    %v76 = vunpack.c.l.b16 %v60
    %v77 = vunpack.c.h.b16 %v60
    %v78 = vunpack.c.l.b16 %v61
    %v79 = vunpack.c.h.b16 %v61
    %v80 = vpack.c.b16 %v78, %v76
    %v81 = vpack.c.b16 %v79, %v77
    %vm84 = vcmask 130048
    %v86 = vsel %vm84, %v59, 0
    %88 = vmatprep.subr.bf16.mxu0 %v81
    %89 = vmatpush1.bf16.msra.mxu0 %v80
    %90 = vmatprep.subr.bf16.mxu0 0
    %91 = vmatpush1.bf16.msra.mxu0 0
    %92 = vmatprep.subr.bf16.mxu0 0
    %93 = vmatpush1.bf16.msra.mxu0 0
    %94 = vmatprep.subr.bf16.mxu0 0
    %95 = vmatpush1.bf16.msra.mxu0 0
    %96 = vmatprep.subr.bf16.mxu0 0
    %97 = vmatpush1.bf16.msra.mxu0 0
    %98 = vmatprep.subr.bf16.mxu0 0
    %99 = vmatpush1.bf16.msra.mxu0 0
    %100 = vmatprep.subr.bf16.mxu0 0
    %101 = vmatpush1.bf16.msra.mxu0 0
    %102 = vmatprep.subr.bf16.mxu0 0
    %103 = vmatpush1.bf16.msra.mxu0 0
    %104 = vmatprep.subr.bf16.mxu0 0
    %105 = vmatpush1.bf16.msra.mxu0 0
    %106 = vmatprep.subr.bf16.mxu0 0
    %107 = vmatpush1.bf16.msra.mxu0 0
    %108 = vmatprep.subr.bf16.mxu0 0
    %109 = vmatpush1.bf16.msra.mxu0 0
    %110 = vmatprep.subr.bf16.mxu0 0
    %111 = vmatpush1.bf16.msra.mxu0 0
    %112 = vmatprep.subr.bf16.mxu0 0
    %113 = vmatpush1.bf16.msra.mxu0 0
    %114 = vmatprep.subr.bf16.mxu0 0
    %115 = vmatpush1.bf16.msra.mxu0 0
    %116 = vmatprep.subr.bf16.mxu0 0
    %117 = vmatpush1.bf16.msra.mxu0 0
    %118 = vmatprep.subr.bf16.mxu0 0
    %119 = vmatpush1.bf16.msra.mxu0 0
    %120 = vmatprep.mubr.bf16.mxu0 0
    %121 = vmatmul.mubr.bf16.gmra.mrb[0].mxu0 %v86
    %v122 = vpop.f32.mrb[0].mxu0
    %v123 = vadd.f32 %v67, %v122
    %v124 = vpop.f32.mrb[0].mxu0
    %v125 = vadd.f32 %v71, %v124
    %v126 = vpop.f32.mrb[0].mxu0
    %v127 = vpop.f32.mrb[0].mxu0
    %128 = vdwg.mxu0
    %v129 = vmax.f32 %v123, 0.0
    %v130 = vmax.f32 %v125, 0.0
    %v131 = vpack.c.bf16 %v129, %v129
    %v132 = vpack.c.bf16 %v130, %v130
    %v133 = vld [vmem:[#allocation4] sm:$0xf]
    %v134 = vld [vmem:[#allocation4 + $0x4] sm:$0xf]
    %v135 = vld [vmem:[#allocation4 + $0x8] sm:$0xf]
    %v136 = vld [vmem:[#allocation4 + $0xc] sm:$0xf]
    %v137 = vld [vmem:[#allocation4 + $0x10] sm:$0xf]
    %v138 = vld [vmem:[#allocation4 + $0x14] sm:$0xf]
    %v139 = vld [vmem:[#allocation4 + $0x18] sm:$0xf]
    %v140 = vld [vmem:[#allocation4 + $0x1c] sm:$0xf]
    %v141 = vld [vmem:[#allocation4 + $0x20] sm:$0xf]
    %v142 = vld [vmem:[#allocation4 + $0x24] sm:$0xf]
    %v143 = vld [vmem:[#allocation4 + $0x28] sm:$0xf]
    %v144 = vld [vmem:[#allocation4 + $0x2c] sm:$0xf]
    %v145 = vld [vmem:[#allocation4 + $0x30] sm:$0xf]
    %v146 = vld [vmem:[#allocation4 + $0x34] sm:$0xf]
    %v147 = vld [vmem:[#allocation4 + $0x38] sm:$0xf]
    %v148 = vld [vmem:[#allocation4 + $0x3c] sm:$0xf]
    %v149 = vld [vmem:[#allocation4 + $0x40] sm:$0xf]
    %v150 = vld [vmem:[#allocation4 + $0x44] sm:$0xf]
    %v151 = vld [vmem:[#allocation4 + $0x48] sm:$0xf]
    %v152 = vld [vmem:[#allocation4 + $0x4c] sm:$0xf]
    %v153 = vld [vmem:[#allocation4 + $0x50] sm:$0xf]
    %v154 = vld [vmem:[#allocation4 + $0x54] sm:$0xf]
    %v155 = vld [vmem:[#allocation4 + $0x58] sm:$0xf]
    %v156 = vld [vmem:[#allocation4 + $0x5c] sm:$0xf]
    %v157 = vld [vmem:[#allocation4 + $0x60] sm:$0xf]
    %v158 = vld [vmem:[#allocation4 + $0x64] sm:$0xf]
    %v159 = vld [vmem:[#allocation4 + $0x68] sm:$0xf]
    %v160 = vld [vmem:[#allocation4 + $0x6c] sm:$0xf]
    %v161 = vld [vmem:[#allocation4 + $0x70] sm:$0xf]
    %v162 = vld [vmem:[#allocation4 + $0x74] sm:$0xf]
    %v163 = vld [vmem:[#allocation4 + $0x78] sm:$0xf]
    %v164 = vld [vmem:[#allocation4 + $0x7c] sm:$0xf]
    %v165 = vld [vmem:[%s4] sm:$0x1]
    %v167 = vlaneseq
    %v168 = vshrl.u32 %v167, 7
    %v169 = vsub.s32 0, %v168
    %v170 = vrot.slane %v165, %v169
    %v204 = vunpack.c.l.b16 %v133
    %v205 = vunpack.c.l.b16 %v134
    %v206 = vunpack.c.l.b16 %v135
    %v207 = vunpack.c.l.b16 %v136
    %v208 = vunpack.c.l.b16 %v137
    %v209 = vunpack.c.l.b16 %v138
    %v210 = vunpack.c.l.b16 %v139
    %v211 = vunpack.c.l.b16 %v140
    %v212 = vunpack.c.l.b16 %v141
    %v213 = vunpack.c.l.b16 %v142
    %v214 = vunpack.c.l.b16 %v143
    %v215 = vunpack.c.l.b16 %v144
    %v216 = vunpack.c.l.b16 %v145
    %v217 = vunpack.c.l.b16 %v146
    %v218 = vunpack.c.l.b16 %v147
    %v219 = vunpack.c.l.b16 %v148
    %v220 = vunpack.c.l.b16 %v149
    %v221 = vunpack.c.l.b16 %v150
    %v222 = vunpack.c.l.b16 %v151
    %v223 = vunpack.c.l.b16 %v152
    %v224 = vunpack.c.l.b16 %v153
    %v225 = vunpack.c.l.b16 %v154
    %v226 = vunpack.c.l.b16 %v155
    %v227 = vunpack.c.l.b16 %v156
    %v228 = vunpack.c.l.b16 %v157
    %v229 = vunpack.c.l.b16 %v158
    %v230 = vunpack.c.l.b16 %v159
    %v231 = vunpack.c.l.b16 %v160
    %v232 = vunpack.c.l.b16 %v161
    %v233 = vunpack.c.l.b16 %v162
    %v234 = vunpack.c.l.b16 %v163
    %v235 = vunpack.c.l.b16 %v164
    %v236 = vpack.c.b16 %v205, %v204
    %v237 = vpack.c.b16 %v207, %v206
    %v238 = vpack.c.b16 %v209, %v208
    %v239 = vpack.c.b16 %v211, %v210
    %v240 = vpack.c.b16 %v213, %v212
    %v241 = vpack.c.b16 %v215, %v214
    %v242 = vpack.c.b16 %v217, %v216
    %v243 = vpack.c.b16 %v219, %v218
    %v244 = vpack.c.b16 %v221, %v220
    %v245 = vpack.c.b16 %v223, %v222
    %v246 = vpack.c.b16 %v225, %v224
    %v247 = vpack.c.b16 %v227, %v226
    %v248 = vpack.c.b16 %v229, %v228
    %v249 = vpack.c.b16 %v231, %v230
    %v250 = vpack.c.b16 %v233, %v232
    %v251 = vpack.c.b16 %v235, %v234
    %268 = vmatprep.subr.bf16.mxu0 0
    %269 = vmatpush1.bf16.msra.mxu0 %v236
    %270 = vmatprep.subr.bf16.mxu0 0
    %271 = vmatpush1.bf16.msra.mxu0 %v237
    %272 = vmatprep.subr.bf16.mxu0 0
    %273 = vmatpush1.bf16.msra.mxu0 %v238
    %274 = vmatprep.subr.bf16.mxu0 0
    %275 = vmatpush1.bf16.msra.mxu0 %v239
    %276 = vmatprep.subr.bf16.mxu0 0
    %277 = vmatpush1.bf16.msra.mxu0 %v240
    %278 = vmatprep.subr.bf16.mxu0 0
    %279 = vmatpush1.bf16.msra.mxu0 %v241
    %280 = vmatprep.subr.bf16.mxu0 0
    %281 = vmatpush1.bf16.msra.mxu0 %v242
    %282 = vmatprep.subr.bf16.mxu0 0
    %283 = vmatpush1.bf16.msra.mxu0 %v243
    %284 = vmatprep.subr.bf16.mxu0 0
    %285 = vmatpush1.bf16.msra.mxu0 %v244
    %286 = vmatprep.subr.bf16.mxu0 0
    %287 = vmatpush1.bf16.msra.mxu0 %v245
    %288 = vmatprep.subr.bf16.mxu0 0
    %289 = vmatpush1.bf16.msra.mxu0 %v246
    %290 = vmatprep.subr.bf16.mxu0 0
    %291 = vmatpush1.bf16.msra.mxu0 %v247
    %292 = vmatprep.subr.bf16.mxu0 0
    %293 = vmatpush1.bf16.msra.mxu0 %v248
    %294 = vmatprep.subr.bf16.mxu0 0
    %295 = vmatpush1.bf16.msra.mxu0 %v249
    %296 = vmatprep.subr.bf16.mxu0 0
    %297 = vmatpush1.bf16.msra.mxu0 %v250
    %298 = vmatprep.subr.bf16.mxu0 0
    %299 = vmatpush1.bf16.msra.mxu0 %v251
    %300 = vmatprep.mubr.bf16.mxu0 %v132
    %301 = vmatmul.mubr.bf16.gmra.mrb[0].mxu0 %v131
    %v302 = vpop.f32.mrb[0].mxu0
    %v303 = vadd.f32 %v170, %v302
    %v304 = vpop.f32.mrb[0].mxu0
    %v305 = vpop.f32.mrb[0].mxu0
    %v306 = vpop.f32.mrb[0].mxu0
    %307 = vdwg.mxu0
    %v308 = vmax.f32 %v303, 0.0
    %v309 = vpack.c.bf16 %v308, %v308
    %v310 = vld [vmem:[%s5] sm:$0xf]
    %v311 = vld [vmem:[%s5 + $0x4] sm:$0xf]
    %v312 = vld [vmem:[%s5 + $0x8] sm:$0xf]
    %v313 = vld [vmem:[%s5 + $0xc] sm:$0xf]
    %v314 = vld [vmem:[%s5 + $0x10] sm:$0xf]
    %v315 = vld [vmem:[%s5 + $0x14] sm:$0xf]
    %v316 = vld [vmem:[%s5 + $0x18] sm:$0xf]
    %v317 = vld [vmem:[%s5 + $0x1c] sm:$0xf]
    %v318 = vld [vmem:[%s5 + $0x20] sm:$0xf]
    %v319 = vld [vmem:[%s5 + $0x24] sm:$0xf]
    %v320 = vld [vmem:[%s5 + $0x28] sm:$0xf]
    %v321 = vld [vmem:[%s5 + $0x2c] sm:$0xf]
    %v322 = vld [vmem:[%s5 + $0x30] sm:$0xf]
    %v323 = vld [vmem:[%s5 + $0x34] sm:$0xf]
    %v324 = vld [vmem:[%s5 + $0x38] sm:$0xf]
    %v325 = vld [vmem:[%s5 + $0x3c] sm:$0xf]
    %v326 = vld [vmem:[%s6] sm:$0x1]
    %v328 = vlaneseq
    %v329 = vshrl.u32 %v328, 7
    %v330 = vsub.s32 0, %v329
    %v331 = vrot.slane %v326, %v330
    %v349 = vunpack.c.l.b16 %v310
    %v350 = vunpack.c.l.b16 %v311
    %v351 = vunpack.c.l.b16 %v312
    %v352 = vunpack.c.l.b16 %v313
    %v353 = vunpack.c.l.b16 %v314
    %v354 = vunpack.c.l.b16 %v315
    %v355 = vunpack.c.l.b16 %v316
    %v356 = vunpack.c.l.b16 %v317
    %v357 = vunpack.c.l.b16 %v318
    %v358 = vunpack.c.l.b16 %v319
    %v359 = vunpack.c.l.b16 %v320
    %v360 = vunpack.c.l.b16 %v321
    %v361 = vunpack.c.l.b16 %v322
    %v362 = vunpack.c.l.b16 %v323
    %v363 = vunpack.c.l.b16 %v324
    %v364 = vunpack.c.l.b16 %v325
    %v365 = vpack.c.b16 %v350, %v349
    %v366 = vpack.c.b16 %v352, %v351
    %v367 = vpack.c.b16 %v354, %v353
    %v368 = vpack.c.b16 %v356, %v355
    %v369 = vpack.c.b16 %v358, %v357
    %v370 = vpack.c.b16 %v360, %v359
    %v371 = vpack.c.b16 %v362, %v361
    %v372 = vpack.c.b16 %v364, %v363
    %381 = vmatprep.subr.bf16.mxu0 0
    %382 = vmatpush1.bf16.msra.mxu0 %v365
    %383 = vmatprep.subr.bf16.mxu0 0
    %384 = vmatpush1.bf16.msra.mxu0 %v366
    %385 = vmatprep.subr.bf16.mxu0 0
    %386 = vmatpush1.bf16.msra.mxu0 %v367
    %387 = vmatprep.subr.bf16.mxu0 0
    %388 = vmatpush1.bf16.msra.mxu0 %v368
    %389 = vmatprep.subr.bf16.mxu0 0
    %390 = vmatpush1.bf16.msra.mxu0 %v369
    %391 = vmatprep.subr.bf16.mxu0 0
    %392 = vmatpush1.bf16.msra.mxu0 %v370
    %393 = vmatprep.subr.bf16.mxu0 0
    %394 = vmatpush1.bf16.msra.mxu0 %v371
    %395 = vmatprep.subr.bf16.mxu0 0
    %396 = vmatpush1.bf16.msra.mxu0 %v372
    %397 = vmatprep.subr.bf16.mxu0 0
    %398 = vmatpush1.bf16.msra.mxu0 0
    %399 = vmatprep.subr.bf16.mxu0 0
    %400 = vmatpush1.bf16.msra.mxu0 0
    %401 = vmatprep.subr.bf16.mxu0 0
    %402 = vmatpush1.bf16.msra.mxu0 0
    %403 = vmatprep.subr.bf16.mxu0 0
    %404 = vmatpush1.bf16.msra.mxu0 0
    %405 = vmatprep.subr.bf16.mxu0 0
    %406 = vmatpush1.bf16.msra.mxu0 0
    %407 = vmatprep.subr.bf16.mxu0 0
    %408 = vmatpush1.bf16.msra.mxu0 0
    %409 = vmatprep.subr.bf16.mxu0 0
    %410 = vmatpush1.bf16.msra.mxu0 0
    %411 = vmatprep.subr.bf16.mxu0 0
    %412 = vmatpush1.bf16.msra.mxu0 0
    %413 = vmatprep.mubr.bf16.mxu0 0
    %414 = vmatmul.mubr.bf16.gmra.mrb[0].mxu0 %v309
    %v415 = vpop.f32.mrb[0].mxu0
    %v416 = vadd.f32 %v331, %v415
    %v417 = vpop.f32.mrb[0].mxu0
    %v418 = vpop.f32.mrb[0].mxu0
    %v419 = vpop.f32.mrb[0].mxu0
    %420 = vdwg.mxu0
    %v421 = vmax.f32 %v416, 0.0
    %v422 = vpack.c.bf16 %v421, %v421
    %v423 = vld [vmem:[%s7] sm:$0xf]
    %v424 = vld [vmem:[%s7 + $0x4] sm:$0xf]
    %v425 = vld [vmem:[%s7 + $0x8] sm:$0xf]
    %v426 = vld [vmem:[%s7 + $0xc] sm:$0xf]
    %v427 = vld [vmem:[%s7 + $0x10] sm:$0xf]
    %v428 = vld [vmem:[%s7 + $0x14] sm:$0xf]
    %v429 = vld [vmem:[%s7 + $0x18] sm:$0xf]
    %v430 = vld [vmem:[%s7 + $0x1c] sm:$0xf]
    %v431 = vld [vmem:[%s7 + $0x20] sm:$0xf]
    %v432 = vld [vmem:[%s7 + $0x24] sm:$0xf]
    %v433 = vld [vmem:[%s7 + $0x28] sm:$0xf]
    %v434 = vld [vmem:[%s7 + $0x2c] sm:$0xf]
    %v435 = vld [vmem:[%s7 + $0x30] sm:$0xf]
    %v436 = vld [vmem:[%s7 + $0x34] sm:$0xf]
    %v437 = vld [vmem:[%s7 + $0x38] sm:$0xf]
    %v438 = vld [vmem:[%s7 + $0x3c] sm:$0xf]
    %v439 = vld [vmem:[%s8] sm:$0x1]
    %v441 = vlaneseq
    %v442 = vshrl.u32 %v441, 7
    %v443 = vsub.s32 0, %v442
    %v444 = vrot.slane %v439, %v443
    %v462 = vunpack.c.l.b16 %v423
    %v463 = vunpack.c.l.b16 %v424
    %v464 = vunpack.c.l.b16 %v425
    %v465 = vunpack.c.l.b16 %v426
    %v466 = vunpack.c.l.b16 %v427
    %v467 = vunpack.c.l.b16 %v428
    %v468 = vunpack.c.l.b16 %v429
    %v469 = vunpack.c.l.b16 %v430
    %v470 = vunpack.c.l.b16 %v431
    %v471 = vunpack.c.l.b16 %v432
    %v472 = vunpack.c.l.b16 %v433
    %v473 = vunpack.c.l.b16 %v434
    %v474 = vunpack.c.l.b16 %v435
    %v475 = vunpack.c.l.b16 %v436
    %v476 = vunpack.c.l.b16 %v437
    %v477 = vunpack.c.l.b16 %v438
    %v478 = vpack.c.b16 %v463, %v462
    %v479 = vpack.c.b16 %v465, %v464
    %v480 = vpack.c.b16 %v467, %v466
    %v481 = vpack.c.b16 %v469, %v468
    %v482 = vpack.c.b16 %v471, %v470
    %v483 = vpack.c.b16 %v473, %v472
    %v484 = vpack.c.b16 %v475, %v474
    %v485 = vpack.c.b16 %v477, %v476
    %494 = vmatprep.subr.bf16.mxu0 0
    %495 = vmatpush1.bf16.msra.mxu0 %v478
    %496 = vmatprep.subr.bf16.mxu0 0
    %497 = vmatpush1.bf16.msra.mxu0 %v479
    %498 = vmatprep.subr.bf16.mxu0 0
    %499 = vmatpush1.bf16.msra.mxu0 %v480
    %500 = vmatprep.subr.bf16.mxu0 0
    %501 = vmatpush1.bf16.msra.mxu0 %v481
    %502 = vmatprep.subr.bf16.mxu0 0
    %503 = vmatpush1.bf16.msra.mxu0 %v482
    %504 = vmatprep.subr.bf16.mxu0 0
    %505 = vmatpush1.bf16.msra.mxu0 %v483
    %506 = vmatprep.subr.bf16.mxu0 0
    %507 = vmatpush1.bf16.msra.mxu0 %v484
    %508 = vmatprep.subr.bf16.mxu0 0
    %509 = vmatpush1.bf16.msra.mxu0 %v485
    %510 = vmatprep.subr.bf16.mxu0 0
    %511 = vmatpush1.bf16.msra.mxu0 0
    %512 = vmatprep.subr.bf16.mxu0 0
    %513 = vmatpush1.bf16.msra.mxu0 0
    %514 = vmatprep.subr.bf16.mxu0 0
    %515 = vmatpush1.bf16.msra.mxu0 0
    %516 = vmatprep.subr.bf16.mxu0 0
    %517 = vmatpush1.bf16.msra.mxu0 0
    %518 = vmatprep.subr.bf16.mxu0 0
    %519 = vmatpush1.bf16.msra.mxu0 0
    %520 = vmatprep.subr.bf16.mxu0 0
    %521 = vmatpush1.bf16.msra.mxu0 0
    %522 = vmatprep.subr.bf16.mxu0 0
    %523 = vmatpush1.bf16.msra.mxu0 0
    %524 = vmatprep.subr.bf16.mxu0 0
    %525 = vmatpush1.bf16.msra.mxu0 0
    %526 = vmatprep.mubr.bf16.mxu0 0
    %527 = vmatmul.mubr.bf16.gmra.mrb[0].mxu0 %v422
    %v528 = vpop.f32.mrb[0].mxu0
    %v529 = vadd.f32 %v444, %v528
    %v530 = vpop.f32.mrb[0].mxu0
    %v531 = vpop.f32.mrb[0].mxu0
    %v532 = vpop.f32.mrb[0].mxu0
    %533 = vdwg.mxu0
    %vm534 = vcmask 15360
    %535 = vst.msk [vmem:[%s9] sm:$0xff] %vm534, %v529
    // Predicated region
    $region46: #{tpu_custom_call.1} parent=1 // pred_check
      _
    $region47: #{tpu_custom_call.1} parent=1 // pred_check_branch
      %537 = sbr.rel (0) target = $region49
    $region48: #{tpu_custom_call.1} parent=1 // pred_region
      _
    $region49: #{tpu_custom_call.1} parent=1 // pred_fallthru
      _
    // Predicated region
    $region50: #{tpu_custom_call.1} parent=1 // pred_check
      _
    $region51: #{tpu_custom_call.1} parent=1 // pred_check_branch
      %539 = sbr.rel (0) target = $region53
    $region52: #{tpu_custom_call.1} parent=1 // pred_region
      _
    $region53: #{tpu_custom_call.1} parent=1 // pred_fallthru
      _
    %540 = vsyncpa [#allocation3], 1
    %541 = vsyncpa [#allocation5], 1

</llo_original>
